<compile_context>
chip_gen: v5e
topology: v5e:2x2
jax: 0.10.0
libtpu: 0.0.40
codegen_flags: <defaults>
</compile_context>

<pallas_src>
import jax
import jax.numpy as jnp
from jax.experimental import pallas as pl
from jax.experimental.pallas import tpu as pltpu

EPS = 1e-10


def _l2norm_kernel(w_ref, x_ref, o_ref):
    # w_ref: (1, C, 1)   x_ref / o_ref: (1, C, TILE_S)
    x = x_ref[...].astype(jnp.float32)
    ss = jnp.sum(x * x, axis=1, keepdims=True)            # (1, 1, TILE_S)
    inv = pl.reciprocal(jnp.sqrt(ss) + EPS)               # exact 1/(sqrt+eps)
    w = w_ref[...].astype(jnp.float32)                    # (1, C, 1)
    o_ref[...] = (x * inv * w).astype(o_ref.dtype)


def l2norm_pallas(x_nchw, weight, *, tile_bytes=4 * 1024 * 1024):
    """x_nchw: (N, C, H, W); weight: (C,). Returns (N, C, H, W)."""
    n, c, h, w = x_nchw.shape
    s = h * w
    x3d = x_nchw.reshape(n, c, s)  # trailing-dim merge: no data movement
    itemsize = jnp.dtype(x3d.dtype).itemsize

    # Lane-dense spatial tile: multiple of 128 (or the full extent when small),
    # capped by the per-tile VMEM budget and by round_up(S, 128).
    if s <= 128:
        tile_s = s
    else:
        by_budget = max(128, ((tile_bytes // (c * itemsize)) // 128) * 128)
        tile_s = int(min(by_budget, ((s + 127) // 128) * 128))

    grid = (n, pl.cdiv(s, tile_s))

    # 2x input + 2x output buffers (+ weight + headroom); keep within v7x's
    # 64 MiB physical VMEM while raising v5e's 16 MiB scoped default.
    needed = 4 * c * tile_s * itemsize + (1 << 20)
    vmem_limit = int(min(64 * 1024 * 1024, max(32 * 1024 * 1024, needed)))

    out3d = pl.pallas_call(
        _l2norm_kernel,
        out_shape=jax.ShapeDtypeStruct((n, c, s), x3d.dtype),
        grid_spec=pltpu.PrefetchScalarGridSpec(
            num_scalar_prefetch=0,
            grid=grid,
            in_specs=[
                pl.BlockSpec((1, c, 1), lambda i, j: (0, 0, 0)),       # weight (resident)
                pl.BlockSpec((1, c, tile_s), lambda i, j: (i, 0, j)),  # x tile
            ],
            out_specs=pl.BlockSpec((1, c, tile_s), lambda i, j: (i, 0, j)),
        ),
        compiler_params=pltpu.CompilerParams(
            dimension_semantics=("parallel", "parallel"),
            vmem_limit_bytes=vmem_limit,
        ),
    )(weight.reshape(1, c, 1), x3d)

    return out3d.reshape(n, c, h, w)


def l2norm_ref(x_nchw, weight):
    norm = jnp.sqrt(jnp.sum(x_nchw * x_nchw, axis=1, keepdims=True)) + EPS
    xn = x_nchw / norm
    return weight[None, :, None, None] * xn


if __name__ == "__main__":
    key = jax.random.PRNGKey(0)
    scale = 20.0  # L2Norm(n_chan, scale): weight initialized to constant `scale`

    # Main small test shape.
    N, C, H, W = 2, 4, 16, 16
    k1, k2 = jax.random.split(key)
    x = jax.random.normal(k1, (N, C, H, W), dtype=jnp.float32)
    weight = jnp.full((C,), scale, dtype=jnp.float32)

    out = jax.block_until_ready(l2norm_pallas(x, weight))
    ref = l2norm_ref(x, weight)
    assert out.shape == (N, C, H, W)
    assert jnp.allclose(out, ref, atol=1e-5, rtol=1e-5)

    # Ragged spatial extent (H*W not a multiple of 128) -> partial tail block,
    # exercising the cdiv grid path instead of a whole-array fallback.
    N2, C2, H2, W2 = 2, 8, 19, 19
    x2 = jax.random.normal(k2, (N2, C2, H2, W2), dtype=jnp.float32)
    weight2 = jnp.full((C2,), scale, dtype=jnp.float32)

    out2 = jax.block_until_ready(l2norm_pallas(x2, weight2))
    ref2 = l2norm_ref(x2, weight2)
    assert out2.shape == (N2, C2, H2, W2)
    assert jnp.allclose(out2, ref2, atol=1e-5, rtol=1e-5)

    print("KERNEL_OK")
</pallas_src>

<mosaic_0001>
module attributes {stable_mosaic.version = 11 : i64} {
  func.func @_l2norm_kernel(%arg0: i32, %arg1: i32, %arg2: memref<1x4x1xf32, #tpu.memory_space<vmem>>, %arg3: memref<1x4x256xf32, #tpu.memory_space<vmem>>, %arg4: memref<1x4x256xf32, #tpu.memory_space<vmem>>) attributes {dimension_semantics = [#tpu.dimension_semantics<parallel>, #tpu.dimension_semantics<parallel>], iteration_bounds = array<i64: 2, 1>, scalar_prefetch = 0 : i64, scratch_operands = 0 : i64, tpu.core_type = #tpu.core_type<tc>, window_params = [{pipeline_mode = #tpu.pipeline_mode<synchronous>, transform_indices = @transform_0, window_bounds = array<i64: 1, 4, 1>}, {transform_indices = @transform_1, window_bounds = array<i64: 1, 4, 256>}, {transform_indices = @transform_2, window_bounds = array<i64: 1, 4, 256>}]} {
    %c0 = arith.constant 0 : index
    %c0_0 = arith.constant 0 : index
    %c0_1 = arith.constant 0 : index
    %0 = vector.load %arg3[%c0, %c0_0, %c0_1] : memref<1x4x256xf32, #tpu.memory_space<vmem>>, vector<1x4x256xf32>
    %1 = arith.mulf %0, %0 : vector<1x4x256xf32>
    %cst = arith.constant dense<0.000000e+00> : vector<1x256xf32>
    %2 = vector.multi_reduction <add>, %1, %cst [1] : vector<1x4x256xf32> to vector<1x256xf32>
    %3 = vector.shape_cast %2 : vector<1x256xf32> to vector<1x1x256xf32>
    %4 = math.sqrt %3 : vector<1x1x256xf32>
    %cst_2 = arith.constant 1.000000e-10 : f32
    %5 = vector.broadcast %cst_2 : f32 to vector<1x1x256xf32>
    %6 = arith.addf %4, %5 : vector<1x1x256xf32>
    %7 = tpu.reciprocal %6 : vector<1x1x256xf32> -> vector<1x1x256xf32>
    %c0_3 = arith.constant 0 : index
    %c0_4 = arith.constant 0 : index
    %c0_5 = arith.constant 0 : index
    %8 = vector.load %arg2[%c0_3, %c0_4, %c0_5] : memref<1x4x1xf32, #tpu.memory_space<vmem>>, vector<1x4x1xf32>
    %9 = vector.broadcast %7 : vector<1x1x256xf32> to vector<1x4x256xf32>
    %10 = arith.mulf %0, %9 : vector<1x4x256xf32>
    %11 = vector.broadcast %8 : vector<1x4x1xf32> to vector<1x4x256xf32>
    %12 = arith.mulf %10, %11 : vector<1x4x256xf32>
    %c0_6 = arith.constant 0 : index
    %c0_7 = arith.constant 0 : index
    %c0_8 = arith.constant 0 : index
    %13 = vector.load %arg4[%c0_6, %c0_7, %c0_8] : memref<1x4x256xf32, #tpu.memory_space<vmem>>, vector<1x4x256xf32>
    tpu.vector_store %arg4[%c0_6, %c0_7, %c0_8], %12 {strides = array<i32>} : memref<1x4x256xf32, #tpu.memory_space<vmem>>, vector<1x4x256xf32>,
    return
  }
  func.func @transform_0(%arg0: i32, %arg1: i32) -> (i32, i32, i32) {
    %c0_i32 = arith.constant 0 : i32
    %c0_i32_0 = arith.constant 0 : i32
    %c0_i32_1 = arith.constant 0 : i32
    %c0_i32_2 = arith.constant 0 : i32
    return %c0_i32, %c0_i32_0, %c0_i32_1 : i32, i32, i32
  }
  func.func @transform_1(%arg0: i32, %arg1: i32) -> (i32, i32, i32) {
    %c0_i32 = arith.constant 0 : i32
    %c0_i32_0 = arith.constant 0 : i32
    return %arg0, %c0_i32, %arg1 : i32, i32, i32
  }
  func.func @transform_2(%arg0: i32, %arg1: i32) -> (i32, i32, i32) {
    %c0_i32 = arith.constant 0 : i32
    %c0_i32_0 = arith.constant 0 : i32
    return %arg0, %c0_i32, %arg1 : i32, i32, i32
  }
}

</mosaic_0001>

<llo_original>
// kernel: tpu_custom_call.1
$region0: #{tpu_custom_call.1}
  #allocation0 [shape = 'u32[]', space=smem, size = 0x4, offset = 0x4, fixed_abs, tag = 'smem constant byte address 0x4 - core index']
  #allocation1 [shape = 'u32[72,128]{1,0:T(1,128)}', space=vmem, size = 0x9000, scoped, tag = 'internal scratch']
  %s0 = inlined_call_operand.vmem [shape: f32[1,4,1], index: 0, kind: input, shape index: {}]
  %s1 = inlined_call_operand.hbm [shape: f32[2,4,256], index: 1, kind: input, shape index: {}]
  %s2 = inlined_call_operand.hbm [shape: f32[2,4,256], index: 2, kind: output, shape index: {}]
  %s3 = sld [smem:[#allocation0]]
  $region45: #{tpu_custom_call.1} parent=0
    _
  %s5 = ssub.s32 1, %s3
  %s6 = scalar_select 0, %s5, %s3
  $region1: #{tpu_custom_call.1} parent=0
    #allocation2 [shape = 'u8[8192]{0}', space=vmem, size = 0x2000, scoped, tag = 'input window, operand 1']
    #allocation3 [shape = 's32[2]{0}', space=sflag, size = 0x8, scoped, tag = 'scoped memory for tpu_custom_call.1']
    #allocation4 [shape = 's32[2]{0}', space=sflag, size = 0x8, scoped, tag = 'scoped memory for tpu_custom_call.1']
    #allocation5 [shape = 'u8[8192]{0}', space=vmem, size = 0x2000, scoped, tag = 'output window, operand 0']
    %7 = vsyncpa [#allocation3], 0
    %s8 = scalar_lea.sflag [#allocation3], 1
    %9 = vsyncpa %s8, 0
    %10 = vsyncpa [#allocation4], 0
    %s11 = scalar_lea.sflag [#allocation4], 1
    %12 = vsyncpa %s11, 0
    loop: start=0, step=1, limit=4
    $region2: #{tpu_custom_call.1} parent=1 // loop_pre_header
      _
    $region3: #{tpu_custom_call.1} parent=1 // loop_header
      %s14 = sphi 0, %s18
      %p15 = scmp.ge.s32.totalorder %s14, 4
      %s21 = sphi 0, %s33
      %s22 = sphi 0, %s29
      %s23 = sphi 0, %s21
      %s24 = sphi 0, %s22
      %s25 = sphi 0, %s23
      %s26 = sphi 0, %s24
      %s34 = sphi 0, %s34
      %s36 = sphi 0, %s34
      %s37 = sphi 0, %s36
      %s51 = sphi 0, %s37
      %s59 = sphi 0, %s61
      %s62 = sphi 0, %s59
      %s63 = sphi 0, %s62
      %s79 = sphi 0, %s63
      %s87 = sphi 0, %s89
      %s90 = sphi 0, %s87
      %s91 = sphi 0, %s90
      %s107 = sphi 0, %s91
    $region4: #{tpu_custom_call.1} parent=1 // loop_header_branch
      %17 = sbr.rel (%p15) target = $region8
    $region5: #{tpu_custom_call.1} parent=1 // loop_body
      %s19 = ssub.s32 %s14, 1
      %s20 = ssub.s32 %s14, 2
      %s27 = sadd.s32 1, %s22
      %p28 = scmp.ge.s32.totalorder %s27, 1
      %s29 = scalar_select %p28, 0, %s27
      %s30 = sadd.s32 1, %s21
      %s31 = scalar_select %p28, %s30, %s21
      %p32 = scmp.ge.s32.totalorder %s31, 2
      %s33 = scalar_select %p32, 0, %s31
      %s35 = sadd.s32 %s34, 1
      %p38 = scmp.eq.s32.totalorder %s14, 1
      %p39 = scmp.ne.s32.totalorder %s34, %s36
      %p40 = scmp.eq.s32.totalorder %s14, 0
      %p41 = por %p39, %p40
      %p42 = scmp.ne.s32.totalorder %s34, %s36
      %p43 = scmp.eq.s32.totalorder %s19, 1
      %p44 = por %p42, %p43
      %p45 = scmp.ne.s32.totalorder %s36, %s37
      %p46 = scmp.eq.s32.totalorder %s19, 0
      %p47 = por %p45, %p46
      %p48 = scmp.ne.s32.totalorder %s36, %s37
      %p49 = scmp.eq.s32.totalorder %s20, 1
      %p50 = por %p48, %p49
      %p52 = scmp.ne.s32.totalorder %s37, %s51
      %p53 = scmp.eq.s32.totalorder %s20, 0
      %p54 = por %p52, %p53
      %s55 = ssub.s32 %s21, %s33
      %s56 = ssub.s32 %s22, %s29
      %s57 = sor.u32 %s55, %s56
      %p58 = scmp.eq.s32.totalorder %s57, 0
      %s60 = sadd.s32 %s59, 1
      %s61 = scalar_select %p58, %s59, %s60
      %p64 = pneg %p58
      %p65 = scmp.eq.s32.totalorder %s14, 1
      %p66 = por %p64, %p65
      %p67 = scmp.ne.s32.totalorder %s59, %s62
      %p68 = scmp.eq.s32.totalorder %s14, 0
      %p69 = por %p67, %p68
      %p70 = scmp.ne.s32.totalorder %s59, %s62
      %p71 = scmp.eq.s32.totalorder %s19, 1
      %p72 = por %p70, %p71
      %p73 = scmp.ne.s32.totalorder %s62, %s63
      %p74 = scmp.eq.s32.totalorder %s19, 0
      %p75 = por %p73, %p74
      %p76 = scmp.ne.s32.totalorder %s62, %s63
      %p77 = scmp.eq.s32.totalorder %s20, 1
      %p78 = por %p76, %p77
      %p80 = scmp.ne.s32.totalorder %s63, %s79
      %p81 = scmp.eq.s32.totalorder %s20, 0
      %p82 = por %p80, %p81
      %s83 = ssub.s32 %s21, %s33
      %s84 = ssub.s32 %s22, %s29
      %s85 = sor.u32 %s83, %s84
      %p86 = scmp.eq.s32.totalorder %s85, 0
      %s88 = sadd.s32 %s87, 1
      %s89 = scalar_select %p86, %s87, %s88
      %p92 = pneg %p86
      %p93 = scmp.eq.s32.totalorder %s14, 1
      %p94 = por %p92, %p93
      %p95 = scmp.ne.s32.totalorder %s87, %s90
      %p96 = scmp.eq.s32.totalorder %s14, 0
      %p97 = por %p95, %p96
      %p98 = scmp.ne.s32.totalorder %s87, %s90
      %p99 = scmp.eq.s32.totalorder %s19, 1
      %p100 = por %p98, %p99
      %p101 = scmp.ne.s32.totalorder %s90, %s91
      %p102 = scmp.eq.s32.totalorder %s19, 0
      %p103 = por %p101, %p102
      %p104 = scmp.ne.s32.totalorder %s90, %s91
      %p105 = scmp.eq.s32.totalorder %s20, 1
      %p106 = por %p104, %p105
      %p108 = scmp.ne.s32.totalorder %s91, %s107
      %p109 = scmp.eq.s32.totalorder %s20, 0
      %p110 = por %p108, %p109
      %p111 = scmp.le.s32.totalorder 1, %s14
      %p112 = scmp.lt.s32.totalorder %s14, 3
      %p113 = pnand %p111, %p112
      %p114 = pneg %p113
      // Predicated region
      $region9: #{tpu_custom_call.1} parent=5 // pred_check
        _
      $region10: #{tpu_custom_call.1} parent=5 // pred_check_branch
        %116 = sbr.rel (%p113) target = $region12
      $region11: #{tpu_custom_call.1} parent=5 // pred_region
        %s117 = ssub.s32 %s14, 1
        // Predicated region
        $region13: #{tpu_custom_call.1} parent=11 // pred_check
          %p118 = pneg %p47
        $region14: #{tpu_custom_call.1} parent=11 // pred_check_branch
          %120 = sbr.rel (%p118) target = $region16
        $region15: #{tpu_custom_call.1} parent=11 // pred_region
          _
        $region16: #{tpu_custom_call.1} parent=11 // pred_fallthru
          _
      $region12: #{tpu_custom_call.1} parent=5 // pred_fallthru
        _
      %p121 = scmp.lt.s32.totalorder %s14, 2
      // Predicated region
      $region17: #{tpu_custom_call.1} parent=5 // pred_check
        %p122 = pneg %p121
      $region18: #{tpu_custom_call.1} parent=5 // pred_check_branch
        %124 = sbr.rel (%p122) target = $region20
      $region19: #{tpu_custom_call.1} parent=5 // pred_region
        // Predicated region
        $region21: #{tpu_custom_call.1} parent=19 // pred_check
          %p125 = pneg %p69
        $region22: #{tpu_custom_call.1} parent=19 // pred_check_branch
          %127 = sbr.rel (%p125) target = $region24
        $region23: #{tpu_custom_call.1} parent=19 // pred_region
          %s128 = sand.u32 %s59, 1
          %s129 = scalar_lea.sflag [#allocation3], %s128
          %s130 = sand.u32 %s59, 1
          %s131 = smul.addr %s130, 8
          %s132 = scalar_lea.vmem [#allocation2], %s131
          %s133 = smul.u32 2, %s22
          %135 = vsyncadd %s129, 0
          %s136 = smul.addr %s21, 2
          %s137 = sadd.s32 %s133, %s136
          %s138 = smul.addr %s137, 4
          %s139 = scalar_lea.hbm %s1, %s138
          %s141 = sshll.u32 %s139, 4
          %s142 = int_to_ptr.hbm [resolvable:$true] %s141
          %s143 = sshll.u32 %s132, 4
          %s144 = int_to_ptr.vmem [resolvable:$true] %s143
          %146 = dma.hbm_to_vmem [thread:$0]  %s142, 128, %s144, %s129
        $region24: #{tpu_custom_call.1} parent=19 // pred_fallthru
          _
      $region20: #{tpu_custom_call.1} parent=5 // pred_fallthru
        _
      %p147 = scmp.le.s32.totalorder 1, %s14
      %p148 = scmp.lt.s32.totalorder %s14, 3
      %p149 = pnand %p147, %p148
      %p150 = pneg %p149
      // Predicated region
      $region25: #{tpu_custom_call.1} parent=5 // pred_check
        _
      $region26: #{tpu_custom_call.1} parent=5 // pred_check_branch
        %152 = sbr.rel (%p149) target = $region28
      $region27: #{tpu_custom_call.1} parent=5 // pred_region
        %s153 = ssub.s32 %s14, 1
        %s154 = sand.u32 %s62, 1
        %s155 = scalar_lea.sflag [#allocation3], %s154
        %s156 = sand.u32 %s62, 1
        %s157 = smul.addr %s156, 8
        %s158 = scalar_lea.vmem [#allocation2], %s157
        // Predicated region
        $region29: #{tpu_custom_call.1} parent=27 // pred_check
          %p159 = pneg %p75
        $region30: #{tpu_custom_call.1} parent=27 // pred_check_branch
          %161 = sbr.rel (%p159) target = $region32
        $region31: #{tpu_custom_call.1} parent=27 // pred_region
          %163 = dma.done %s155, 128
        $region32: #{tpu_custom_call.1} parent=27 // pred_fallthru
          _
        %p164 = pneg %p47
        %p165 = pneg %p44
        %s166 = sand.u32 %s62, 1
        %s167 = scalar_lea.sflag [#allocation3], %s166
        %s168 = sand.u32 %s62, 1
        %s169 = smul.addr %s168, 8
        %s170 = scalar_lea.vmem [#allocation2], %s169
        %p171 = pneg %p75
        %p172 = pneg %p72
        %p173 = pneg %p103
        %p174 = pneg %p100
        %s175 = sand.u32 %s90, 1
        %s176 = scalar_lea.sflag [#allocation4], %s175
        %s177 = sand.u32 %s90, 1
        %s178 = smul.addr %s177, 8
        %s179 = scalar_lea.vmem [#allocation5], %s178
        %s180 = smul.u32 2, %s24
        %s181 = smul.u32 2, %s24
        %v182 = vld [vmem:[%s158] sm:$0xff]
        %v183 = vmul.f32 %v182, %v182
        %185 = vst [vmem:[#allocation1] ss:$2 sm:$0xff] %v183
        %v186 = vld.sshfl [vmem:[#allocation1] sm:$0xff pattern:$0x75316420]
        %v187 = vld.sshfl [vmem:[#allocation1 + $0x8] sm:$0xff pattern:$0x75316420]
        %vm190 = vcmask 1043456
        %v191 = vsel %vm190, %v186, 0.0
        %v192 = vrot.slane %v191, 4
        %v193 = vadd.f32 %v191, %v192
        %v194 = vrot.slane %v193, 2
        %v195 = vadd.f32 %v193, %v194
        %v196 = vrot.slane %v195, 1
        %v197 = vadd.f32 %v195, %v196
        %v198 = vsel %vm190, %v187, 0.0
        %v199 = vrot.slane %v198, 4
        %v200 = vadd.f32 %v198, %v199
        %v201 = vrot.slane %v200, 2
        %v202 = vadd.f32 %v200, %v201
        %v203 = vrot.slane %v202, 1
        %v204 = vadd.f32 %v202, %v203
        %v205 = vrsqrt.pop %v197
        %v206 = vmul.f32 %v205, %v197
        %v207 = vmul.f32 %v206, %v205
        %v208 = vmul.f32 0.5, %v207
        %v209 = vsub.f32 1.5, %v208
        %v210 = vmul.f32 %v205, %v209
        %v211 = vmul.f32 %v197, %v210
        %vm212 = vcmp.eq.f32.partialorder %v197, inf
        %v213 = vsel %vm212, %v197, %v211
        %vm214 = vcmp.eq.f32.partialorder %v197, 0.0
        %v215 = vand.u32 %v197, 2147483648
        %v216 = vsel %vm214, %v215, %v213
        %v217 = vrsqrt.pop %v204
        %v218 = vmul.f32 %v217, %v204
        %v219 = vmul.f32 %v218, %v217
        %v220 = vmul.f32 0.5, %v219
        %v221 = vsub.f32 1.5, %v220
        %v222 = vmul.f32 %v217, %v221
        %v223 = vmul.f32 %v204, %v222
        %vm224 = vcmp.eq.f32.partialorder %v204, inf
        %v225 = vsel %vm224, %v204, %v223
        %vm226 = vcmp.eq.f32.partialorder %v204, 0.0
        %v227 = vand.u32 %v204, 2147483648
        %v228 = vsel %vm226, %v227, %v225
        %v229 = vadd.f32 %v216, 1e-10
        %v230 = vadd.f32 %v228, 1e-10
        %v231 = vrcp.pop %v229
        %v232 = vmul.f32 %v229, %v231
        %v233 = vsub.f32 1.0, %v232
        %v234 = vmul.f32 %v231, %v233
        %v235 = vadd.f32 %v231, %v234
        %vm236 = vweird.f32 %v229
        %vm237 = vweird.f32 %v231
        %vm238 = vmor %vm236, %vm237
        %v239 = vsel %vm238, %v231, %v235
        %v240 = vand.u32 2147483647, %v229
        %vm241 = vcmp.eq.f32.partialorder %v240, 8.507059e+37
        %v242 = vand.u32 %v229, 2147483648
        %v243 = vor.u32 1.1754944e-38, %v242
        %v244 = vsel %vm241, %v243, %v239
        %v245 = vrcp.pop %v230
        %v246 = vmul.f32 %v230, %v245
        %v247 = vsub.f32 1.0, %v246
        %v248 = vmul.f32 %v245, %v247
        %v249 = vadd.f32 %v245, %v248
        %vm250 = vweird.f32 %v230
        %vm251 = vweird.f32 %v245
        %vm252 = vmor %vm250, %vm251
        %v253 = vsel %vm252, %v245, %v249
        %v254 = vand.u32 2147483647, %v230
        %vm255 = vcmp.eq.f32.partialorder %v254, 8.507059e+37
        %v256 = vand.u32 %v230, 2147483648
        %v257 = vor.u32 1.1754944e-38, %v256
        %v258 = vsel %vm255, %v257, %v253
        %v259 = vld [vmem:[%s0] sm:$0xf]
        %v262 = vrot.slane %v258, 4
        %v263 = vsel %vm190, %v244, %v262
        %v265 = vmul.f32 %v182, %v263
        %267 = vset.pattern.permute.xlu0 0
        %268 = vperm.xlu0 %267, %v259
        %v269 = vpop.permute.xlu0 %268
        %v271 = vunpack.c.l.s4 839922192
        %v272 = vunpack.c.0.s8 %v271
        %v273 = vperm.slane %v269, %v272
        %v275 = vmul.f32 %v265, %v273
        %276 = vst [vmem:[%s179] sm:$0xff] %v275
        %s277 = sand.u32 %s90, 1
        %s278 = scalar_lea.sflag [#allocation4], %s277
        %s279 = sand.u32 %s90, 1
        %s280 = smul.addr %s279, 8
        %s281 = scalar_lea.vmem [#allocation5], %s280
        // Predicated region
        $region33: #{tpu_custom_call.1} parent=27 // pred_check
          %p282 = pneg %p100
        $region34: #{tpu_custom_call.1} parent=27 // pred_check_branch
          %284 = sbr.rel (%p282) target = $region36
        $region35: #{tpu_custom_call.1} parent=27 // pred_region
          %s285 = smul.u32 2, %s24
          %287 = vsyncadd %s278, 0
          %s288 = smul.addr %s23, 2
          %s289 = sadd.s32 %s285, %s288
          %s290 = smul.addr %s289, 4
          %s291 = scalar_lea.hbm %s2, %s290
          %s293 = sshll.u32 %s281, 4
          %s294 = int_to_ptr.vmem [resolvable:$true] %s293
          %s295 = sshll.u32 %s291, 4
          %s296 = int_to_ptr.hbm [resolvable:$true] %s295
          %298 = dma.vmem_to_hbm [thread:$0]  %s294, 128, %s296, %s278
        $region36: #{tpu_custom_call.1} parent=27 // pred_fallthru
          _
      $region28: #{tpu_custom_call.1} parent=5 // pred_fallthru
        _
      %p299 = scmp.le.s32.totalorder 2, %s14
      // Predicated region
      $region37: #{tpu_custom_call.1} parent=5 // pred_check
        %p300 = pneg %p299
      $region38: #{tpu_custom_call.1} parent=5 // pred_check_branch
        %302 = sbr.rel (%p300) target = $region40
      $region39: #{tpu_custom_call.1} parent=5 // pred_region
        %s303 = ssub.s32 %s14, 2
        // Predicated region
        $region41: #{tpu_custom_call.1} parent=39 // pred_check
          %p304 = pneg %p106
        $region42: #{tpu_custom_call.1} parent=39 // pred_check_branch
          %306 = sbr.rel (%p304) target = $region44
        $region43: #{tpu_custom_call.1} parent=39 // pred_region
          %s307 = sand.u32 %s91, 1
          %s308 = scalar_lea.sflag [#allocation4], %s307
          %s309 = sand.u32 %s91, 1
          %s310 = smul.addr %s309, 8
          %s311 = scalar_lea.vmem [#allocation5], %s310
          %313 = dma.done %s308, 128
        $region44: #{tpu_custom_call.1} parent=39 // pred_fallthru
          _
      $region40: #{tpu_custom_call.1} parent=5 // pred_fallthru
        _
    $region6: #{tpu_custom_call.1} parent=1 // loop_footer
      %s18 = sadd.s32 1, %s14
    $region7: #{tpu_custom_call.1} parent=1 // loop_footer_branch
      %13 = sbr.rel target = $region3
    $region8: #{tpu_custom_call.1} parent=1 // loop_exit
      _
    %314 = vsyncpa [#allocation3], 1
    %s315 = scalar_lea.sflag [#allocation3], 1
    %316 = vsyncpa %s315, 1
    %317 = vsyncpa [#allocation4], 1
    %s318 = scalar_lea.sflag [#allocation4], 1
    %319 = vsyncpa %s318, 1

</llo_original>
